<compile_context>
chip_gen: v7x
topology: tpu7x:2x2x1
jax: 0.10.0
libtpu: 0.0.40
codegen_flags: <defaults>
</compile_context>

<pallas_src>
import jax
import jax.numpy as jnp
from jax.experimental import pallas as pl
from jax.experimental.pallas import tpu as pltpu


def _round_up(x, m):
    return ((x + m - 1) // m) * m


def _cdiv(a, b):
    return -(-a // b)


def _tpu_limits():
    """Best-effort query of per-core VMEM capacity and TensorCore count."""
    vmem = 64 << 20     # conservative default: v7x has 64 MiB per TC
    cores = 1
    try:
        info = pltpu.get_tpu_info()
        for name in ("vmem_capacity_bytes", "vmem_size_bytes", "vmem_bytes"):
            v = getattr(info, name, None)
            if isinstance(v, int) and v > 0:
                vmem = v
                break
        for name in ("num_cores", "core_count", "num_tensorcores",
                     "tensorcore_count"):
            c = getattr(info, name, None)
            if isinstance(c, int) and c > 0:
                cores = c
                break
    except Exception:
        pass
    return vmem, cores


# ---------------------------------------------------------------------------
# Kernels
# ---------------------------------------------------------------------------

def _ffn_kernel_reduce(x_ref, w12_ref, w3_ref, o_ref, acc_ref):
    # x_ref:   (tm, E)
    # w12_ref: (E, 2*th)   fused [fc1 tile | fc2 tile]   (leading tile dim squeezed)
    # w3_ref:  (th, E)
    # o_ref:   (tm, E)
    # acc_ref: (tm, E) f32, resident across the hidden (reduction) axis
    h = pl.program_id(1)

    @pl.when(h == 0)
    def _():
        acc_ref[...] = jnp.zeros_like(acc_ref)

    th = w3_ref.shape[0]
    x = x_ref[...]
    # Fused fc1 + fc2: a single MXU pass over x per hidden tile.
    h12 = jnp.dot(x, w12_ref[...], preferred_element_type=jnp.float32)
    h1 = h12[:, :th]
    h2 = h12[:, th:]
    # SiLU gate in f32 (VPU/EUP path).  Note: gated is rounded to the weight
    # dtype (bf16) before the fc3 matmul -- intentional precision tradeoff.
    gated = (h1 * jax.nn.sigmoid(h1)) * h2
    acc_ref[...] += jnp.dot(gated.astype(w3_ref.dtype), w3_ref[...],
                            preferred_element_type=jnp.float32)

    @pl.when(h == pl.num_programs(1) - 1)
    def _():
        o_ref[...] = acc_ref[...].astype(o_ref.dtype)


def _ffn_kernel_single(x_ref, w12_ref, w3_ref, o_ref):
    # Fast path: whole hidden dim in one tile -> no reduction axis, no scratch.
    th = w3_ref.shape[0]
    x = x_ref[...]
    h12 = jnp.dot(x, w12_ref[...], preferred_element_type=jnp.float32)
    h1 = h12[:, :th]
    h2 = h12[:, th:]
    gated = (h1 * jax.nn.sigmoid(h1)) * h2
    o_ref[...] = jnp.dot(gated.astype(w3_ref.dtype), w3_ref[...],
                         preferred_element_type=jnp.float32).astype(o_ref.dtype)


# ---------------------------------------------------------------------------
# Init-time weight repacking (done ONCE, not per forward call)
# ---------------------------------------------------------------------------

def _choose_hidden_tile(E, H, wbytes, vmem_cap):
    """Pick a hidden-dim tile: multiple of 256 (v6e/v7x MXU width) when possible,
    as large as the per-step double-buffered weight budget allows."""
    if H % 128 != 0:
        return H                      # only whole-H (full-extent blocks) possible
    gran = 256 if H % 256 == 0 else 128
    budget = int(vmem_cap * 0.45)     # leave room for x/out/acc/intermediates
    best = gran
    cand = gran
    while cand <= H:
        if H % cand == 0:
            step_bytes = 2 * (E * 2 * cand + cand * E) * wbytes
            if step_bytes <= budget:
                best = cand
        cand += gran
    return best


def prepare_ffn_weights(w1, w2, w3, *, th=None, compute_dtype=jnp.bfloat16):
    """Repack PyTorch nn.Linear weights for the kernel.

    w1, w2: [H, E] (out, in);  w3: [E, H] (out, in).
    Returns:
      w12: [H//th, E, 2*th]  tile-major fused weights; tile h's columns are
           [w1 tile h | w2 tile h] and each tile is contiguous in HBM.
      w3t: [H, E]
    """
    H, E = w1.shape
    assert w2.shape == (H, E) and w3.shape == (E, H)
    wb = jnp.dtype(compute_dtype).itemsize
    vmem_cap, _ = _tpu_limits()
    if th is None:
        th = _choose_hidden_tile(E, H, wb, vmem_cap)
    assert H % th == 0 and (th % 128 == 0 or th == H), \
        "th must be a multiple of 128 dividing H (or th == H)"
    nH = H // th

    w1t = jnp.transpose(w1).astype(compute_dtype)       # (E, H)
    w2t = jnp.transpose(w2).astype(compute_dtype)       # (E, H)
    w12 = jnp.concatenate(
        [w1t.reshape(E, nH, th), w2t.reshape(E, nH, th)], axis=2)   # (E, nH, 2*th)
    w12 = jnp.transpose(w12, (1, 0, 2))                 # (nH, E, 2*th), tile-major
    w3t = jnp.transpose(w3).astype(compute_dtype)       # (H, E)
    return w12, w3t


# ---------------------------------------------------------------------------
# Forward
# ---------------------------------------------------------------------------

def feed_forward(x, w12, w3t, *, tm=512):
    """x: [B, T, E];  w12: [H//th, E, 2*th] (tile-major fused);  w3t: [H, E]."""
    B, T, E = x.shape
    nH, E_w, two_th = w12.shape
    th = two_th // 2
    H = w3t.shape[0]
    assert E_w == E and nH * th == H and w3t.shape == (H, E)

    cdt = w12.dtype                            # compute (matmul) dtype
    xb = wb = jnp.dtype(cdt).itemsize
    ob = jnp.dtype(x.dtype).itemsize
    sub = 16 if jnp.dtype(cdt).itemsize == 2 else 8   # sublane packing granularity

    vmem_cap, cores = _tpu_limits()
    fast = (nH == 1)

    M = B * T
    tm = max(sub, min(_round_up(tm, sub), _round_up(M, sub)))

    def vmem_est(tm_):
        est = (2 * tm_ * E * xb            # double-buffered x tiles
               + 2 * (E * 2 * th) * wb     # double-buffered fused fc1/fc2 tile
               + 2 * (th * E) * wb         # double-buffered fc3 tile
               + 2 * tm_ * E * ob          # double-buffered output tiles
               + tm_ * 2 * th * 4          # h12 f32 intermediate
               + tm_ * th * 6)             # gate products f32 + bf16 cast of gated
        if not fast:
            est += tm_ * E * 4             # f32 accumulator scratch
        return est

    # Shrink the row tile until the working set fits the generation's VMEM
    # (v7x only has 64 MiB per TC).
    while vmem_est(tm) > int(0.80 * vmem_cap) and tm > sub:
        tm = max(sub, _round_up(tm // 2, sub))

    # Row-tile count: minimize padding, and (when we can detect >1 TensorCore,
    # e.g. v7x) make sure axis 0 has enough tiles to feed every core.
    n_row = _cdiv(M, tm)
    if cores > 1 and n_row < cores and M >= cores * sub:
        n_row = cores
    tm = _round_up(_cdiv(M, n_row), sub)
    M_pad = n_row * tm

    x2d = x.reshape(M, E).astype(cdt)
    if M_pad != M:
        x2d = jnp.pad(x2d, ((0, M_pad - M), (0, 0)))

    vmem_limit = min(int(0.98 * vmem_cap),
                     max(int(vmem_est(tm) * 1.25) + (4 << 20), 32 << 20))

    cost = pl.CostEstimate(
        flops=6 * M * E * H,                               # 4MEH (fc1+fc2) + 2MEH (fc3)
        transcendentals=M * H,                             # sigmoid
        bytes_accessed=M * E * (xb + ob) + n_row * 3 * E * H * wb,
    )

    compiler_params = pltpu.CompilerParams(
        dimension_semantics=("parallel",) if fast else ("parallel", "arbitrary"),
        vmem_limit_bytes=vmem_limit,
    )
    out_shape = jax.ShapeDtypeStruct((M_pad, E), x.dtype)

    if fast:
        out2d = pl.pallas_call(
            _ffn_kernel_single,
            out_shape=out_shape,
            grid_spec=pltpu.PrefetchScalarGridSpec(
                num_scalar_prefetch=0,
                grid=(n_row,),
                in_specs=[
                    pl.BlockSpec((tm, E), lambda i: (i, 0)),
                    pl.BlockSpec((None, E, 2 * th), lambda i: (0, 0, 0)),
                    pl.BlockSpec((th, E), lambda i: (0, 0)),
                ],
                out_specs=pl.BlockSpec((tm, E), lambda i: (i, 0)),
            ),
            compiler_params=compiler_params,
            cost_estimate=cost,
        )(x2d, w12, w3t)
    else:
        out2d = pl.pallas_call(
            _ffn_kernel_reduce,
            out_shape=out_shape,
            grid_spec=pltpu.PrefetchScalarGridSpec(
                num_scalar_prefetch=0,
                grid=(n_row, nH),
                in_specs=[
                    pl.BlockSpec((tm, E), lambda i, h: (i, 0)),
                    pl.BlockSpec((None, E, 2 * th), lambda i, h: (h, 0, 0)),
                    pl.BlockSpec((th, E), lambda i, h: (h, 0)),
                ],
                out_specs=pl.BlockSpec((tm, E), lambda i, h: (i, 0)),
                scratch_shapes=[pltpu.VMEM((tm, E), jnp.float32)],
            ),
            compiler_params=compiler_params,
            cost_estimate=cost,
        )(x2d, w12, w3t)

    return out2d[:M].reshape(B, T, E)


# ---------------------------------------------------------------------------
# Reference + demo
# ---------------------------------------------------------------------------

def _reference(x, w1, w2, w3):
    xf = x.astype(jnp.float32)
    h1 = jnp.einsum("bte,he->bth", xf, w1.astype(jnp.float32))
    h2 = jnp.einsum("bte,he->bth", xf, w2.astype(jnp.float32))
    g = h1 * jax.nn.sigmoid(h1) * h2
    return jnp.einsum("bth,eh->bte", g, w3.astype(jnp.float32))


if __name__ == "__main__":
    # Small Qwen3-like config: emb_dim=128, hidden_dim=256, bf16 weights/activations.
    B, T, E, H = 2, 8, 128, 256
    dtype = jnp.bfloat16

    key = jax.random.PRNGKey(0)
    kx, k1, k2, k3 = jax.random.split(key, 4)
    x = jax.random.normal(kx, (B, T, E), jnp.float32).astype(dtype)
    # PyTorch nn.Linear weight layout: [out_features, in_features]
    w1 = (jax.random.normal(k1, (H, E), jnp.float32) * 0.02).astype(dtype)
    w2 = (jax.random.normal(k2, (H, E), jnp.float32) * 0.02).astype(dtype)
    w3 = (jax.random.normal(k3, (E, H), jnp.float32) * 0.02).astype(dtype)

    # Init-time repack (transpose + fc1/fc2 fusion, tile-major) -- done once.
    w12, w3t = prepare_ffn_weights(w1, w2, w3, compute_dtype=dtype)

    out = feed_forward(x, w12, w3t, tm=512)
    jax.block_until_ready(out)

    ref = _reference(x, w1, w2, w3)
    assert out.shape == (B, T, E)
    err = float(jnp.max(jnp.abs(out.astype(jnp.float32) - ref)))
    assert err < 2e-2, f"max abs err {err}"
    print("KERNEL_OK")
</pallas_src>

<mosaic_0001>
module attributes {stable_mosaic.version = 11 : i64} {
  func.func @_ffn_kernel_single(%arg0: i32, %arg1: memref<16x128xbf16, #tpu.memory_space<vmem>>, %arg2: memref<1x128x512xbf16, #tpu.memory_space<vmem>>, %arg3: memref<256x128xbf16, #tpu.memory_space<vmem>>, %arg4: memref<16x128xbf16, #tpu.memory_space<vmem>>) attributes {dimension_semantics = [#tpu.dimension_semantics<parallel>], iteration_bounds = array<i64: 1>, scalar_prefetch = 0 : i64, scratch_operands = 0 : i64, tpu.core_type = #tpu.core_type<tc>, window_params = [{transform_indices = @transform_0, window_bounds = array<i64: 16, 128>}, {pipeline_mode = #tpu.pipeline_mode<synchronous>, transform_indices = @transform_1, window_bounds = array<i64: 1, 128, 512>}, {pipeline_mode = #tpu.pipeline_mode<synchronous>, transform_indices = @transform_2, window_bounds = array<i64: 256, 128>}, {transform_indices = @transform_3, window_bounds = array<i64: 16, 128>}]} {
    %c0 = arith.constant 0 : index
    %c0_0 = arith.constant 0 : index
    %0 = vector.load %arg1[%c0, %c0_0] : memref<16x128xbf16, #tpu.memory_space<vmem>>, vector<16x128xbf16>
    %c0_1 = arith.constant 0 : index
    %c0_2 = arith.constant 0 : index
    %c0_3 = arith.constant 0 : index
    %1 = vector.load %arg2[%c0_1, %c0_2, %c0_3] : memref<1x128x512xbf16, #tpu.memory_space<vmem>>, vector<1x128x512xbf16>
    %2 = vector.shape_cast %1 : vector<1x128x512xbf16> to vector<128x512xbf16>
    %cst = arith.constant dense<0.000000e+00> : vector<16x512xf32>
    %3 = tpu.matmul %0, %2, %cst {dimension_numbers = #tpu.dot_dimension_numbers<[1], [0], [0], [1], [0, 0, 1, 1], [], []>} : vector<16x128xbf16>, vector<128x512xbf16>, vector<16x512xf32> -> vector<16x512xf32>
    %4 = vector.extract_strided_slice %3 {offsets = [0, 0], sizes = [16, 256], strides = [1, 1]} : vector<16x512xf32> to vector<16x256xf32>
    %5 = vector.extract_strided_slice %3 {offsets = [0, 256], sizes = [16, 256], strides = [1, 1]} : vector<16x512xf32> to vector<16x256xf32>
    %6 = arith.negf %4 : vector<16x256xf32>
    %7 = math.exp %6 : vector<16x256xf32>
    %cst_4 = arith.constant 1.000000e+00 : f32
    %8 = vector.broadcast %cst_4 : f32 to vector<16x256xf32>
    %9 = arith.addf %8, %7 : vector<16x256xf32>
    %10 = arith.divf %8, %9 : vector<16x256xf32>
    %11 = arith.mulf %4, %10 : vector<16x256xf32>
    %12 = arith.mulf %11, %5 : vector<16x256xf32>
    %13 = arith.truncf %12 : vector<16x256xf32> to vector<16x256xbf16>
    %c0_5 = arith.constant 0 : index
    %c0_6 = arith.constant 0 : index
    %14 = vector.load %arg3[%c0_5, %c0_6] : memref<256x128xbf16, #tpu.memory_space<vmem>>, vector<256x128xbf16>
    %cst_7 = arith.constant dense<0.000000e+00> : vector<16x128xf32>
    %15 = tpu.matmul %13, %14, %cst_7 {dimension_numbers = #tpu.dot_dimension_numbers<[1], [0], [0], [1], [0, 0, 1, 1], [], []>} : vector<16x256xbf16>, vector<256x128xbf16>, vector<16x128xf32> -> vector<16x128xf32>
    %16 = arith.truncf %15 : vector<16x128xf32> to vector<16x128xbf16>
    %c0_8 = arith.constant 0 : index
    %c0_9 = arith.constant 0 : index
    %17 = vector.load %arg4[%c0_8, %c0_9] : memref<16x128xbf16, #tpu.memory_space<vmem>>, vector<16x128xbf16>
    tpu.vector_store %arg4[%c0_8, %c0_9], %16 {strides = array<i32>} : memref<16x128xbf16, #tpu.memory_space<vmem>>, vector<16x128xbf16>,
    return
  }
  func.func @transform_0(%arg0: i32) -> (i32, i32) {
    %c0_i32 = arith.constant 0 : i32
    %c0_i32_0 = arith.constant 0 : i32
    return %arg0, %c0_i32 : i32, i32
  }
  func.func @transform_1(%arg0: i32) -> (i32, i32, i32) {
    %c0_i32 = arith.constant 0 : i32
    %c0_i32_0 = arith.constant 0 : i32
    %c0_i32_1 = arith.constant 0 : i32
    %c0_i32_2 = arith.constant 0 : i32
    return %c0_i32, %c0_i32_0, %c0_i32_1 : i32, i32, i32
  }
  func.func @transform_2(%arg0: i32) -> (i32, i32) {
    %c0_i32 = arith.constant 0 : i32
    %c0_i32_0 = arith.constant 0 : i32
    %c0_i32_1 = arith.constant 0 : i32
    return %c0_i32, %c0_i32_0 : i32, i32
  }
  func.func @transform_3(%arg0: i32) -> (i32, i32) {
    %c0_i32 = arith.constant 0 : i32
    %c0_i32_0 = arith.constant 0 : i32
    return %arg0, %c0_i32 : i32, i32
  }
}

</mosaic_0001>

<llo_original>
// kernel: tpu_custom_call.1
$region0: #{tpu_custom_call.1}
  #allocation0 [shape = 'u32[]', space=smem, size = 0x4, offset = 0x4, fixed_abs, tag = 'smem constant byte address 0x4 - core index']
  #allocation1 [shape = 'u32[144,128]{1,0:T(1,128)}', space=vmem, size = 0x12000, scoped, tag = 'internal scratch']
  %s0 = inlined_call_operand.hbm [shape: bf16[16,128], index: 0, kind: input, shape index: {}]
  %s1 = inlined_call_operand.hbm [shape: bf16[1,128,512], index: 1, kind: input, shape index: {}]
  %s2 = inlined_call_operand.hbm [shape: bf16[256,128], index: 2, kind: input, shape index: {}]
  %s3 = inlined_call_operand.hbm [shape: bf16[16,128], index: 3, kind: output, shape index: {}]
  %s4 = sld [smem:[#allocation0]]
  $region34: #{tpu_custom_call.1} parent=0
    _
  %s6 = ssub.s32 1, %s4
  %s7 = scalar_select 0, %s6, %s4
  $region1: #{tpu_custom_call.1} parent=0
    #allocation2 [shape = 'u8[4096]{0}', space=vmem, size = 0x1000, scoped, tag = 'input window, operand 0, single buffered']
    #allocation3 [shape = 's32[1]{0}', space=sflag, size = 0x4, scoped, tag = 'scoped memory for tpu_custom_call.1']
    #allocation4 [shape = 's32[1]{0}', space=sflag, size = 0x4, scoped, tag = 'scoped memory for tpu_custom_call.1']
    #allocation5 [shape = 'u8[131072]{0}', space=vmem, size = 0x20000, scoped, tag = 'input window, operand 1, single buffered']
    #allocation6 [shape = 's32[1]{0}', space=sflag, size = 0x4, scoped, tag = 'scoped memory for tpu_custom_call.1']
    #allocation7 [shape = 'u8[65536]{0}', space=vmem, size = 0x10000, scoped, tag = 'input window, operand 2, single buffered']
    #allocation8 [shape = 'u8[4096]{0}', space=vmem, size = 0x1000, scoped, tag = 'output window, operand 0, single buffered']
    %8 = vsyncpa [#allocation3], 0
    %9 = vsyncpa [#allocation6], 0
    %10 = vsyncpa [#allocation4], 0
    // Predicated region
    $region2: #{tpu_custom_call.1} parent=1 // pred_check
      _
    $region3: #{tpu_custom_call.1} parent=1 // pred_check_branch
      %12 = sbr.rel (0) target = $region5
    $region4: #{tpu_custom_call.1} parent=1 // pred_region
      %s14 = ssub.s32 128, 128
      %15 = vsyncadd [#allocation3], %s14
      %s16 = sshll.u32 [#allocation2], 4
      %s17 = int_to_ptr.vmem [resolvable:$true] %s16
      %22 = dma.hbm_to_vmem [thread:$0]  %s0, 128, %s17, [#allocation3], 64, 64, 4
    $region5: #{tpu_custom_call.1} parent=1 // pred_fallthru
      _
    // Predicated region
    $region6: #{tpu_custom_call.1} parent=1 // pred_check
      _
    $region7: #{tpu_custom_call.1} parent=1 // pred_check_branch
      %24 = sbr.rel (0) target = $region9
    $region8: #{tpu_custom_call.1} parent=1 // pred_region
      %s26 = ssub.s32 4096, 4096
      %27 = vsyncadd [#allocation6], %s26
      %s28 = sshll.u32 [#allocation5], 4
      %s29 = int_to_ptr.vmem [resolvable:$true] %s28
      %34 = dma.hbm_to_vmem [thread:$0]  %s1, 4096, %s29, [#allocation6], 256, 256, 16
    $region9: #{tpu_custom_call.1} parent=1 // pred_fallthru
      _
    // Predicated region
    $region10: #{tpu_custom_call.1} parent=1 // pred_check
      _
    $region11: #{tpu_custom_call.1} parent=1 // pred_check_branch
      %36 = sbr.rel (0) target = $region13
    $region12: #{tpu_custom_call.1} parent=1 // pred_region
      %s38 = ssub.s32 2048, 2048
      %39 = vsyncadd [#allocation6], %s38
      %s40 = sshll.u32 [#allocation7], 4
      %s41 = int_to_ptr.vmem [resolvable:$true] %s40
      %46 = dma.hbm_to_vmem [thread:$0]  %s2, 2048, %s41, [#allocation6], 64, 64, 4
    $region13: #{tpu_custom_call.1} parent=1 // pred_fallthru
      _
    // Predicated region
    $region14: #{tpu_custom_call.1} parent=1 // pred_check
      _
    $region15: #{tpu_custom_call.1} parent=1 // pred_check_branch
      %48 = sbr.rel (0) target = $region17
    $region16: #{tpu_custom_call.1} parent=1 // pred_region
      %49 = dma.done [#allocation3], 128
    $region17: #{tpu_custom_call.1} parent=1 // pred_fallthru
      _
    // Predicated region
    $region18: #{tpu_custom_call.1} parent=1 // pred_check
      _
    $region19: #{tpu_custom_call.1} parent=1 // pred_check_branch
      %51 = sbr.rel (0) target = $region21
    $region20: #{tpu_custom_call.1} parent=1 // pred_region
      %52 = dma.done [#allocation6], 4096
    $region21: #{tpu_custom_call.1} parent=1 // pred_fallthru
      _
    // Predicated region
    $region22: #{tpu_custom_call.1} parent=1 // pred_check
      _
    $region23: #{tpu_custom_call.1} parent=1 // pred_check_branch
      %54 = sbr.rel (0) target = $region25
    $region24: #{tpu_custom_call.1} parent=1 // pred_region
      %55 = dma.done [#allocation6], 2048
    $region25: #{tpu_custom_call.1} parent=1 // pred_fallthru
      _
    %v57 = vld [vmem:[#allocation2] sm:$0xf]
    %v58 = vld [vmem:[#allocation2 + $0x4] sm:$0xf]
    %v59 = vld [vmem:[#allocation5] sm:$0xff]
    %v60 = vld [vmem:[#allocation5 + $0x8] sm:$0xff]
    %v61 = vld [vmem:[#allocation5 + $0x10] sm:$0xff]
    %v62 = vld [vmem:[#allocation5 + $0x18] sm:$0xff]
    %v63 = vld [vmem:[#allocation5 + $0x20] sm:$0xff]
    %v64 = vld [vmem:[#allocation5 + $0x28] sm:$0xff]
    %v65 = vld [vmem:[#allocation5 + $0x30] sm:$0xff]
    %v66 = vld [vmem:[#allocation5 + $0x38] sm:$0xff]
    %v67 = vld [vmem:[#allocation5 + $0x40] sm:$0xff]
    %v68 = vld [vmem:[#allocation5 + $0x48] sm:$0xff]
    %v69 = vld [vmem:[#allocation5 + $0x50] sm:$0xff]
    %v70 = vld [vmem:[#allocation5 + $0x58] sm:$0xff]
    %v71 = vld [vmem:[#allocation5 + $0x60] sm:$0xff]
    %v72 = vld [vmem:[#allocation5 + $0x68] sm:$0xff]
    %v73 = vld [vmem:[#allocation5 + $0x70] sm:$0xff]
    %v74 = vld [vmem:[#allocation5 + $0x78] sm:$0xff]
    %v75 = vld [vmem:[#allocation5 + $0x80] sm:$0xff]
    %v76 = vld [vmem:[#allocation5 + $0x88] sm:$0xff]
    %v77 = vld [vmem:[#allocation5 + $0x90] sm:$0xff]
    %v78 = vld [vmem:[#allocation5 + $0x98] sm:$0xff]
    %v79 = vld [vmem:[#allocation5 + $0xa0] sm:$0xff]
    %v80 = vld [vmem:[#allocation5 + $0xa8] sm:$0xff]
    %v81 = vld [vmem:[#allocation5 + $0xb0] sm:$0xff]
    %v82 = vld [vmem:[#allocation5 + $0xb8] sm:$0xff]
    %v83 = vld [vmem:[#allocation5 + $0xc0] sm:$0xff]
    %v84 = vld [vmem:[#allocation5 + $0xc8] sm:$0xff]
    %v85 = vld [vmem:[#allocation5 + $0xd0] sm:$0xff]
    %v86 = vld [vmem:[#allocation5 + $0xd8] sm:$0xff]
    %v87 = vld [vmem:[#allocation5 + $0xe0] sm:$0xff]
    %v88 = vld [vmem:[#allocation5 + $0xe8] sm:$0xff]
    %v89 = vld [vmem:[#allocation5 + $0xf0] sm:$0xff]
    %v90 = vld [vmem:[#allocation5 + $0xf8] sm:$0xff]
    %v93 = vunpack.c.l.b16 %v57
    %v94 = vunpack.c.l.b16 %v58
    %v95 = vpack.c.b16 %v94, %v93
    %v129 = vunpack.c.l.b16 %v59
    %v130 = vunpack.c.h.b16 %v59
    %v131 = vunpack.c.l.b16 %v60
    %v132 = vunpack.c.h.b16 %v60
    %v133 = vunpack.c.l.b16 %v61
    %v134 = vunpack.c.h.b16 %v61
    %v135 = vunpack.c.l.b16 %v62
    %v136 = vunpack.c.h.b16 %v62
    %v137 = vunpack.c.l.b16 %v63
    %v138 = vunpack.c.h.b16 %v63
    %v139 = vunpack.c.l.b16 %v64
    %v140 = vunpack.c.h.b16 %v64
    %v141 = vunpack.c.l.b16 %v65
    %v142 = vunpack.c.h.b16 %v65
    %v143 = vunpack.c.l.b16 %v66
    %v144 = vunpack.c.h.b16 %v66
    %v145 = vunpack.c.l.b16 %v67
    %v146 = vunpack.c.h.b16 %v67
    %v147 = vunpack.c.l.b16 %v68
    %v148 = vunpack.c.h.b16 %v68
    %v149 = vunpack.c.l.b16 %v69
    %v150 = vunpack.c.h.b16 %v69
    %v151 = vunpack.c.l.b16 %v70
    %v152 = vunpack.c.h.b16 %v70
    %v153 = vunpack.c.l.b16 %v71
    %v154 = vunpack.c.h.b16 %v71
    %v155 = vunpack.c.l.b16 %v72
    %v156 = vunpack.c.h.b16 %v72
    %v157 = vunpack.c.l.b16 %v73
    %v158 = vunpack.c.h.b16 %v73
    %v159 = vunpack.c.l.b16 %v74
    %v160 = vunpack.c.h.b16 %v74
    %v161 = vunpack.c.l.b16 %v75
    %v162 = vunpack.c.h.b16 %v75
    %v163 = vunpack.c.l.b16 %v76
    %v164 = vunpack.c.h.b16 %v76
    %v165 = vunpack.c.l.b16 %v77
    %v166 = vunpack.c.h.b16 %v77
    %v167 = vunpack.c.l.b16 %v78
    %v168 = vunpack.c.h.b16 %v78
    %v169 = vunpack.c.l.b16 %v79
    %v170 = vunpack.c.h.b16 %v79
    %v171 = vunpack.c.l.b16 %v80
    %v172 = vunpack.c.h.b16 %v80
    %v173 = vunpack.c.l.b16 %v81
    %v174 = vunpack.c.h.b16 %v81
    %v175 = vunpack.c.l.b16 %v82
    %v176 = vunpack.c.h.b16 %v82
    %v177 = vunpack.c.l.b16 %v83
    %v178 = vunpack.c.h.b16 %v83
    %v179 = vunpack.c.l.b16 %v84
    %v180 = vunpack.c.h.b16 %v84
    %v181 = vunpack.c.l.b16 %v85
    %v182 = vunpack.c.h.b16 %v85
    %v183 = vunpack.c.l.b16 %v86
    %v184 = vunpack.c.h.b16 %v86
    %v185 = vunpack.c.l.b16 %v87
    %v186 = vunpack.c.h.b16 %v87
    %v187 = vunpack.c.l.b16 %v88
    %v188 = vunpack.c.h.b16 %v88
    %v189 = vunpack.c.l.b16 %v89
    %v190 = vunpack.c.h.b16 %v89
    %v191 = vunpack.c.l.b16 %v90
    %v192 = vunpack.c.h.b16 %v90
    %v193 = vpack.c.b16 %v133, %v129
    %v194 = vpack.c.b16 %v134, %v130
    %v195 = vpack.c.b16 %v135, %v131
    %v196 = vpack.c.b16 %v136, %v132
    %v197 = vpack.c.b16 %v141, %v137
    %v198 = vpack.c.b16 %v142, %v138
    %v199 = vpack.c.b16 %v143, %v139
    %v200 = vpack.c.b16 %v144, %v140
    %v201 = vpack.c.b16 %v149, %v145
    %v202 = vpack.c.b16 %v150, %v146
    %v203 = vpack.c.b16 %v151, %v147
    %v204 = vpack.c.b16 %v152, %v148
    %v205 = vpack.c.b16 %v157, %v153
    %v206 = vpack.c.b16 %v158, %v154
    %v207 = vpack.c.b16 %v159, %v155
    %v208 = vpack.c.b16 %v160, %v156
    %v209 = vpack.c.b16 %v165, %v161
    %v210 = vpack.c.b16 %v166, %v162
    %v211 = vpack.c.b16 %v167, %v163
    %v212 = vpack.c.b16 %v168, %v164
    %v213 = vpack.c.b16 %v173, %v169
    %v214 = vpack.c.b16 %v174, %v170
    %v215 = vpack.c.b16 %v175, %v171
    %v216 = vpack.c.b16 %v176, %v172
    %v217 = vpack.c.b16 %v181, %v177
    %v218 = vpack.c.b16 %v182, %v178
    %v219 = vpack.c.b16 %v183, %v179
    %v220 = vpack.c.b16 %v184, %v180
    %v221 = vpack.c.b16 %v189, %v185
    %v222 = vpack.c.b16 %v190, %v186
    %v223 = vpack.c.b16 %v191, %v187
    %v224 = vpack.c.b16 %v192, %v188
    %257 = vmatprep.subr.bf16.mxu0 %v194
    %258 = vmatpush1.bf16.msra.mxu0 %v193
    %259 = vmatprep.subr.bf16.mxu0 %v198
    %260 = vmatpush1.bf16.msra.mxu0 %v197
    %261 = vmatprep.subr.bf16.mxu0 %v202
    %262 = vmatpush1.bf16.msra.mxu0 %v201
    %263 = vmatprep.subr.bf16.mxu0 %v206
    %264 = vmatpush1.bf16.msra.mxu0 %v205
    %265 = vmatprep.subr.bf16.mxu0 %v210
    %266 = vmatpush1.bf16.msra.mxu0 %v209
    %267 = vmatprep.subr.bf16.mxu0 %v214
    %268 = vmatpush1.bf16.msra.mxu0 %v213
    %269 = vmatprep.subr.bf16.mxu0 %v218
    %270 = vmatpush1.bf16.msra.mxu0 %v217
    %271 = vmatprep.subr.bf16.mxu0 %v222
    %272 = vmatpush1.bf16.msra.mxu0 %v221
    %273 = vmatprep.subr.bf16.mxu0 0
    %274 = vmatpush1.bf16.msra.mxu0 0
    %275 = vmatprep.subr.bf16.mxu0 0
    %276 = vmatpush1.bf16.msra.mxu0 0
    %277 = vmatprep.subr.bf16.mxu0 0
    %278 = vmatpush1.bf16.msra.mxu0 0
    %279 = vmatprep.subr.bf16.mxu0 0
    %280 = vmatpush1.bf16.msra.mxu0 0
    %281 = vmatprep.subr.bf16.mxu0 0
    %282 = vmatpush1.bf16.msra.mxu0 0
    %283 = vmatprep.subr.bf16.mxu0 0
    %284 = vmatpush1.bf16.msra.mxu0 0
    %285 = vmatprep.subr.bf16.mxu0 0
    %286 = vmatpush1.bf16.msra.mxu0 0
    %287 = vmatprep.subr.bf16.mxu0 0
    %288 = vmatpush1.bf16.msra.mxu0 0
    %289 = vmatprep.mubr.bf16.mxu0 0
    %290 = vmatmul.mubr.bf16.gmra.mrb[0].mxu0 %v95
    %v291 = vpop.f32.mrb[0].mxu0
    %v292 = vadd.f32 0.0, %v291
    %v293 = vpop.f32.mrb[0].mxu0
    %v294 = vadd.f32 0.0, %v293
    %v295 = vpop.f32.mrb[0].mxu0
    %v296 = vadd.f32 0.0, %v295
    %v297 = vpop.f32.mrb[0].mxu0
    %v298 = vadd.f32 0.0, %v297
    %299 = vdwg.mxu0
    %300 = vmatprep.subr.bf16.mxu0 %v196
    %301 = vmatpush1.bf16.msra.mxu0 %v195
    %302 = vmatprep.subr.bf16.mxu0 %v200
    %303 = vmatpush1.bf16.msra.mxu0 %v199
    %304 = vmatprep.subr.bf16.mxu0 %v204
    %305 = vmatpush1.bf16.msra.mxu0 %v203
    %306 = vmatprep.subr.bf16.mxu0 %v208
    %307 = vmatpush1.bf16.msra.mxu0 %v207
    %308 = vmatprep.subr.bf16.mxu0 %v212
    %309 = vmatpush1.bf16.msra.mxu0 %v211
    %310 = vmatprep.subr.bf16.mxu0 %v216
    %311 = vmatpush1.bf16.msra.mxu0 %v215
    %312 = vmatprep.subr.bf16.mxu0 %v220
    %313 = vmatpush1.bf16.msra.mxu0 %v219
    %314 = vmatprep.subr.bf16.mxu0 %v224
    %315 = vmatpush1.bf16.msra.mxu0 %v223
    %316 = vmatprep.subr.bf16.mxu0 0
    %317 = vmatpush1.bf16.msra.mxu0 0
    %318 = vmatprep.subr.bf16.mxu0 0
    %319 = vmatpush1.bf16.msra.mxu0 0
    %320 = vmatprep.subr.bf16.mxu0 0
    %321 = vmatpush1.bf16.msra.mxu0 0
    %322 = vmatprep.subr.bf16.mxu0 0
    %323 = vmatpush1.bf16.msra.mxu0 0
    %324 = vmatprep.subr.bf16.mxu0 0
    %325 = vmatpush1.bf16.msra.mxu0 0
    %326 = vmatprep.subr.bf16.mxu0 0
    %327 = vmatpush1.bf16.msra.mxu0 0
    %328 = vmatprep.subr.bf16.mxu0 0
    %329 = vmatpush1.bf16.msra.mxu0 0
    %330 = vmatprep.subr.bf16.mxu0 0
    %331 = vmatpush1.bf16.msra.mxu0 0
    %332 = vmatprep.mubr.bf16.mxu0 0
    %333 = vmatmul.mubr.bf16.gmra.mrb[0].mxu0 %v95
    %v334 = vpop.f32.mrb[0].mxu0
    %v335 = vadd.f32 0.0, %v334
    %v336 = vpop.f32.mrb[0].mxu0
    %v337 = vadd.f32 0.0, %v336
    %v338 = vpop.f32.mrb[0].mxu0
    %v339 = vadd.f32 0.0, %v338
    %v340 = vpop.f32.mrb[0].mxu0
    %v341 = vadd.f32 0.0, %v340
    %342 = vdwg.mxu0
    %v343 = vxor.u32 %v292, 2147483648
    %v344 = vxor.u32 %v294, 2147483648
    %v345 = vxor.u32 %v296, 2147483648
    %v346 = vxor.u32 %v298, 2147483648
    %v347 = vmul.f32 %v343, 1.442695
    %v348 = vpow.pop %v347
    %v349 = vmul.f32 %v344, 1.442695
    %v350 = vpow.pop %v349
    %v351 = vmul.f32 %v345, 1.442695
    %v352 = vpow.pop %v351
    %v353 = vmul.f32 %v346, 1.442695
    %v354 = vpow.pop %v353
    %v355 = vadd.f32 %v348, 1.0
    %v356 = vadd.f32 %v350, 1.0
    %v357 = vadd.f32 %v352, 1.0
    %v358 = vadd.f32 %v354, 1.0
    %v359 = vrcp.pop %v355
    %v360 = vmul.f32 1.0, %v359
    %v361 = vrcp.pop %v356
    %v362 = vmul.f32 1.0, %v361
    %v363 = vrcp.pop %v357
    %v364 = vmul.f32 1.0, %v363
    %v365 = vrcp.pop %v358
    %v366 = vmul.f32 1.0, %v365
    %v367 = vmul.f32 %v292, %v360
    %v368 = vmul.f32 %v294, %v362
    %v369 = vmul.f32 %v296, %v364
    %v370 = vmul.f32 %v298, %v366
    %v371 = vmul.f32 %v367, %v335
    %v372 = vmul.f32 %v368, %v337
    %v373 = vmul.f32 %v369, %v339
    %v374 = vmul.f32 %v370, %v341
    %v375 = vpack.c.bf16 %v373, %v371
    %v376 = vpack.c.bf16 %v374, %v372
    %v377 = vld [vmem:[#allocation7] sm:$0xf]
    %v378 = vld [vmem:[#allocation7 + $0x4] sm:$0xf]
    %v379 = vld [vmem:[#allocation7 + $0x8] sm:$0xf]
    %v380 = vld [vmem:[#allocation7 + $0xc] sm:$0xf]
    %v381 = vld [vmem:[#allocation7 + $0x10] sm:$0xf]
    %v382 = vld [vmem:[#allocation7 + $0x14] sm:$0xf]
    %v383 = vld [vmem:[#allocation7 + $0x18] sm:$0xf]
    %v384 = vld [vmem:[#allocation7 + $0x1c] sm:$0xf]
    %v385 = vld [vmem:[#allocation7 + $0x20] sm:$0xf]
    %v386 = vld [vmem:[#allocation7 + $0x24] sm:$0xf]
    %v387 = vld [vmem:[#allocation7 + $0x28] sm:$0xf]
    %v388 = vld [vmem:[#allocation7 + $0x2c] sm:$0xf]
    %v389 = vld [vmem:[#allocation7 + $0x30] sm:$0xf]
    %v390 = vld [vmem:[#allocation7 + $0x34] sm:$0xf]
    %v391 = vld [vmem:[#allocation7 + $0x38] sm:$0xf]
    %v392 = vld [vmem:[#allocation7 + $0x3c] sm:$0xf]
    %v393 = vld [vmem:[#allocation7 + $0x40] sm:$0xf]
    %v394 = vld [vmem:[#allocation7 + $0x44] sm:$0xf]
    %v395 = vld [vmem:[#allocation7 + $0x48] sm:$0xf]
    %v396 = vld [vmem:[#allocation7 + $0x4c] sm:$0xf]
    %v397 = vld [vmem:[#allocation7 + $0x50] sm:$0xf]
    %v398 = vld [vmem:[#allocation7 + $0x54] sm:$0xf]
    %v399 = vld [vmem:[#allocation7 + $0x58] sm:$0xf]
    %v400 = vld [vmem:[#allocation7 + $0x5c] sm:$0xf]
    %v401 = vld [vmem:[#allocation7 + $0x60] sm:$0xf]
    %v402 = vld [vmem:[#allocation7 + $0x64] sm:$0xf]
    %v403 = vld [vmem:[#allocation7 + $0x68] sm:$0xf]
    %v404 = vld [vmem:[#allocation7 + $0x6c] sm:$0xf]
    %v405 = vld [vmem:[#allocation7 + $0x70] sm:$0xf]
    %v406 = vld [vmem:[#allocation7 + $0x74] sm:$0xf]
    %v407 = vld [vmem:[#allocation7 + $0x78] sm:$0xf]
    %v408 = vld [vmem:[#allocation7 + $0x7c] sm:$0xf]
    %v441 = vunpack.c.l.b16 %v377
    %v442 = vunpack.c.l.b16 %v378
    %v443 = vunpack.c.l.b16 %v379
    %v444 = vunpack.c.l.b16 %v380
    %v445 = vunpack.c.l.b16 %v381
    %v446 = vunpack.c.l.b16 %v382
    %v447 = vunpack.c.l.b16 %v383
    %v448 = vunpack.c.l.b16 %v384
    %v449 = vunpack.c.l.b16 %v385
    %v450 = vunpack.c.l.b16 %v386
    %v451 = vunpack.c.l.b16 %v387
    %v452 = vunpack.c.l.b16 %v388
    %v453 = vunpack.c.l.b16 %v389
    %v454 = vunpack.c.l.b16 %v390
    %v455 = vunpack.c.l.b16 %v391
    %v456 = vunpack.c.l.b16 %v392
    %v457 = vunpack.c.l.b16 %v393
    %v458 = vunpack.c.l.b16 %v394
    %v459 = vunpack.c.l.b16 %v395
    %v460 = vunpack.c.l.b16 %v396
    %v461 = vunpack.c.l.b16 %v397
    %v462 = vunpack.c.l.b16 %v398
    %v463 = vunpack.c.l.b16 %v399
    %v464 = vunpack.c.l.b16 %v400
    %v465 = vunpack.c.l.b16 %v401
    %v466 = vunpack.c.l.b16 %v402
    %v467 = vunpack.c.l.b16 %v403
    %v468 = vunpack.c.l.b16 %v404
    %v469 = vunpack.c.l.b16 %v405
    %v470 = vunpack.c.l.b16 %v406
    %v471 = vunpack.c.l.b16 %v407
    %v472 = vunpack.c.l.b16 %v408
    %v473 = vpack.c.b16 %v442, %v441
    %v474 = vpack.c.b16 %v444, %v443
    %v475 = vpack.c.b16 %v446, %v445
    %v476 = vpack.c.b16 %v448, %v447
    %v477 = vpack.c.b16 %v450, %v449
    %v478 = vpack.c.b16 %v452, %v451
    %v479 = vpack.c.b16 %v454, %v453
    %v480 = vpack.c.b16 %v456, %v455
    %v481 = vpack.c.b16 %v458, %v457
    %v482 = vpack.c.b16 %v460, %v459
    %v483 = vpack.c.b16 %v462, %v461
    %v484 = vpack.c.b16 %v464, %v463
    %v485 = vpack.c.b16 %v466, %v465
    %v486 = vpack.c.b16 %v468, %v467
    %v487 = vpack.c.b16 %v470, %v469
    %v488 = vpack.c.b16 %v472, %v471
    %505 = vmatprep.subr.bf16.mxu0 0
    %506 = vmatpush1.bf16.msra.mxu0 %v473
    %507 = vmatprep.subr.bf16.mxu0 0
    %508 = vmatpush1.bf16.msra.mxu0 %v474
    %509 = vmatprep.subr.bf16.mxu0 0
    %510 = vmatpush1.bf16.msra.mxu0 %v475
    %511 = vmatprep.subr.bf16.mxu0 0
    %512 = vmatpush1.bf16.msra.mxu0 %v476
    %513 = vmatprep.subr.bf16.mxu0 0
    %514 = vmatpush1.bf16.msra.mxu0 %v477
    %515 = vmatprep.subr.bf16.mxu0 0
    %516 = vmatpush1.bf16.msra.mxu0 %v478
    %517 = vmatprep.subr.bf16.mxu0 0
    %518 = vmatpush1.bf16.msra.mxu0 %v479
    %519 = vmatprep.subr.bf16.mxu0 0
    %520 = vmatpush1.bf16.msra.mxu0 %v480
    %521 = vmatprep.subr.bf16.mxu0 0
    %522 = vmatpush1.bf16.msra.mxu0 %v481
    %523 = vmatprep.subr.bf16.mxu0 0
    %524 = vmatpush1.bf16.msra.mxu0 %v482
    %525 = vmatprep.subr.bf16.mxu0 0
    %526 = vmatpush1.bf16.msra.mxu0 %v483
    %527 = vmatprep.subr.bf16.mxu0 0
    %528 = vmatpush1.bf16.msra.mxu0 %v484
    %529 = vmatprep.subr.bf16.mxu0 0
    %530 = vmatpush1.bf16.msra.mxu0 %v485
    %531 = vmatprep.subr.bf16.mxu0 0
    %532 = vmatpush1.bf16.msra.mxu0 %v486
    %533 = vmatprep.subr.bf16.mxu0 0
    %534 = vmatpush1.bf16.msra.mxu0 %v487
    %535 = vmatprep.subr.bf16.mxu0 0
    %536 = vmatpush1.bf16.msra.mxu0 %v488
    %537 = vmatprep.mubr.bf16.mxu0 %v376
    %538 = vmatmul.mubr.bf16.gmra.mrb[0].mxu0 %v375
    %v539 = vpop.f32.mrb[0].mxu0
    %v540 = vadd.f32 0.0, %v539
    %v541 = vpop.f32.mrb[0].mxu0
    %v542 = vpop.f32.mrb[0].mxu0
    %v543 = vadd.f32 0.0, %v542
    %v544 = vpop.f32.mrb[0].mxu0
    %545 = vdwg.mxu0
    %v546 = vpack.c.bf16 %v543, %v540
    %v548 = vunpack.c.l.b16 %v546
    %v549 = vunpack.c.h.b16 %v546
    %v550 = vpack.c.b16 %v548, %v548
    %v551 = vpack.c.b16 %v549, %v549
    %554 = vst [vmem:[#allocation8] sm:$0xf] %v550
    %555 = vst [vmem:[#allocation8 + $0x4] sm:$0xf] %v551
    // Predicated region
    $region26: #{tpu_custom_call.1} parent=1 // pred_check
      _
    $region27: #{tpu_custom_call.1} parent=1 // pred_check_branch
      %557 = sbr.rel (0) target = $region29
    $region28: #{tpu_custom_call.1} parent=1 // pred_region
      %s559 = ssub.s32 128, 128
      %560 = vsyncadd [#allocation4], %s559
      %s561 = sshll.u32 [#allocation8], 4
      %s562 = int_to_ptr.vmem [resolvable:$true] %s561
      %567 = dma.vmem_to_hbm [thread:$0]  %s562, 128, %s3, [#allocation4], 64, 64, 4
    $region29: #{tpu_custom_call.1} parent=1 // pred_fallthru
      _
    // Predicated region
    $region30: #{tpu_custom_call.1} parent=1 // pred_check
      _
    $region31: #{tpu_custom_call.1} parent=1 // pred_check_branch
      %569 = sbr.rel (0) target = $region33
    $region32: #{tpu_custom_call.1} parent=1 // pred_region
      %570 = dma.done [#allocation4], 128
    $region33: #{tpu_custom_call.1} parent=1 // pred_fallthru
      _
    %571 = vsyncpa [#allocation3], 1
    %572 = vsyncpa [#allocation6], 1
    %573 = vsyncpa [#allocation4], 1

</llo_original>
